<compile_context>
chip_gen: v6e
topology: v6e:2x2x1
jax: 0.10.0
libtpu: 0.0.40
codegen_flags: <defaults>
</compile_context>

<pallas_src>
import functools

import jax
import jax.numpy as jnp
from jax.experimental import pallas as pl
from jax.experimental.pallas import tpu as pltpu

# Hidden widths fixed by the PyTorch module.
H1, H2, H3, H4 = 256, 128, 64, 32
LANE = 128


def _round_up(x, m):
    return (x + m - 1) // m * m


def make_qnet_kernel(d0, tb, nchunk):
    """Build the fused 5-layer MLP kernel for a (tb, d0) input tile."""
    cs = tb // nchunk
    boff = d0  # bias rows start right after W1 inside slab A

    def kernel(x_ref, pa_ref, pb_ref, out_ref):
        # Slab A (width 256): W1 (d0,256) then b1..b5, each on an 8-aligned row.
        w1 = pa_ref[0:d0, :]                        # (d0, 256)
        b1 = pa_ref[boff + 0:boff + 1, :]           # (1, 256)
        b2 = pa_ref[boff + 8:boff + 9, 0:LANE]      # (1, 128)
        b3 = pa_ref[boff + 16:boff + 17, 0:LANE]
        b4 = pa_ref[boff + 24:boff + 25, 0:LANE]
        b5 = pa_ref[boff + 32:boff + 33, 0:LANE]
        # Slab B (width 128): W2..W5 stacked, each zero-padded to 128 lanes.
        w2 = pb_ref[0:256, :]                       # (256, 128)
        w3 = pb_ref[256:384, :]                     # (128, 128)
        w4 = pb_ref[384:512, :]                     # (128, 128)
        w5 = pb_ref[512:640, :]                     # (128, 128)

        # Static unroll over independent batch sub-chunks: lets the scheduler
        # interleave chunk k+1's MXU pushes with chunk k's VPU bias/ReLU.
        for c in range(nchunk):
            lo, hi = c * cs, (c + 1) * cs
            h = x_ref[lo:hi, :]
            h = jnp.maximum(
                jnp.dot(h, w1, preferred_element_type=jnp.float32) + b1, 0.0)
            h = jnp.maximum(
                jnp.dot(h, w2, preferred_element_type=jnp.float32) + b2, 0.0)
            h = jnp.maximum(
                jnp.dot(h, w3, preferred_element_type=jnp.float32) + b3, 0.0)
            h = jnp.maximum(
                jnp.dot(h, w4, preferred_element_type=jnp.float32) + b4, 0.0)
            h = jnp.dot(h, w5, preferred_element_type=jnp.float32) + b5
            # lane-dense 128-wide store (padded cols are exactly zero)
            out_ref[lo:hi, :] = h.astype(out_ref.dtype)

    return kernel


def pack_params(params, state_dim, action_dim):
    """Pack w1..w5 / b1..b5 into two lane-padded f32 slabs.

    In a real RL loop this would be done once per parameter update and cached.
    Zero padding keeps the math exactly equivalent to the unpadded network.
    """
    d0 = _round_up(state_dim, LANE)

    # Slab A (width 256): zero-padded W1 plus the 5 biases on 8-aligned rows.
    slab_a = jnp.zeros((d0 + 40, H1), jnp.float32)
    slab_a = slab_a.at[:state_dim, :].set(params["w1"].astype(jnp.float32))
    slab_a = slab_a.at[d0 + 0, :H1].set(params["b1"].reshape(-1))
    slab_a = slab_a.at[d0 + 8, :H2].set(params["b2"].reshape(-1))
    slab_a = slab_a.at[d0 + 16, :H3].set(params["b3"].reshape(-1))
    slab_a = slab_a.at[d0 + 24, :H4].set(params["b4"].reshape(-1))
    slab_a = slab_a.at[d0 + 32, :action_dim].set(params["b5"].reshape(-1))

    # Slab B (width 128): W2..W5 zero-padded to 128 lanes and stacked.
    w2 = params["w2"].astype(jnp.float32)                                   # (256,128)
    w3 = jnp.zeros((H2, LANE), jnp.float32).at[:, :H3].set(params["w3"])    # (128,128)
    w4 = jnp.zeros((LANE, LANE), jnp.float32).at[:H3, :H4].set(params["w4"])
    w5 = jnp.zeros((LANE, LANE), jnp.float32).at[:H4, :action_dim].set(params["w5"])
    slab_b = jnp.concatenate([w2, w3, w4, w5], axis=0)                      # (640,128)

    return slab_a, slab_b


@functools.partial(jax.jit, static_argnames=("tile_batch",))
def qnetwork_forward(x, params, tile_batch=256):
    """Fused QNetwork forward pass.

    x:      (batch, state_dim) float32
    params: dict w1..w5 of shape (in, out) and b1..b5 of shape (1, out)
    returns (batch, action_dim) float32
    """
    batch, state_dim = x.shape
    action_dim = params["w5"].shape[1]
    assert action_dim <= LANE, "action_dim > 128 not supported by this packing"

    d0 = _round_up(state_dim, LANE)
    slab_a, slab_b = pack_params(params, state_dim, action_dim)

    # Batch tiling: cap at 256 rows so the widest (tb, 256) f32 activation
    # stays within the 64-vreg file; pad batch up to a tile multiple.
    tb = min(tile_batch, _round_up(batch, 8))
    padded_batch = _round_up(batch, tb)
    xp = jnp.zeros((padded_batch, d0), jnp.float32)
    xp = xp.at[:batch, :state_dim].set(x.astype(jnp.float32))

    nchunk = 2 if (tb >= 16 and tb % 16 == 0) else 1
    grid = (padded_batch // tb,)

    out = pl.pallas_call(
        make_qnet_kernel(d0, tb, nchunk),
        out_shape=jax.ShapeDtypeStruct((padded_batch, LANE), jnp.float32),
        grid=grid,
        in_specs=[
            # x: one (tb, d0) tile per grid step (pipelined DMA).
            pl.BlockSpec((tb, d0), lambda i: (i, 0)),
            # parameter slabs: constant block index -> stay VMEM-resident.
            pl.BlockSpec(slab_a.shape, lambda i: (0, 0)),
            pl.BlockSpec(slab_b.shape, lambda i: (0, 0)),
        ],
        out_specs=pl.BlockSpec((tb, LANE), lambda i: (i, 0)),
        compiler_params=pltpu.CompilerParams(
            dimension_semantics=("parallel",)),
    )(xp, slab_a, slab_b)

    return out[:batch, :action_dim]


def init_params(key, state_dim, action_dim):
    """Deterministic init mimicking nn.Linear default (uniform +/- 1/sqrt(fan_in))."""
    dims = [state_dim, H1, H2, H3, H4, action_dim]
    params = {}
    for i in range(5):
        fan_in, fan_out = dims[i], dims[i + 1]
        key, kw, kb = jax.random.split(key, 3)
        bound = 1.0 / jnp.sqrt(jnp.float32(fan_in))
        # stored as (in, out) = transpose of PyTorch's (out, in)
        params[f"w{i + 1}"] = jax.random.uniform(
            kw, (fan_in, fan_out), jnp.float32, -bound, bound)
        params[f"b{i + 1}"] = jax.random.uniform(
            kb, (1, fan_out), jnp.float32, -bound, bound)
    return params


def reference_forward(x, params):
    """Plain-JAX reference of the same forward pass."""
    h = x
    for i in range(1, 5):
        h = jnp.maximum(h @ params[f"w{i}"] + params[f"b{i}"], 0.0)
    return h @ params["w5"] + params["b5"]


if __name__ == "__main__":
    state_dim, action_dim = 16, 4

    key = jax.random.PRNGKey(0)
    key, kx1, kx2 = jax.random.split(key, 3)
    params = init_params(key, state_dim, action_dim)

    # Small batch: single grid step, no padding of the batch axis.
    x_small = jax.random.normal(kx1, (8, state_dim), dtype=jnp.float32)
    out_small = jax.block_until_ready(qnetwork_forward(x_small, params))
    ref_small = reference_forward(x_small, params)
    assert out_small.shape == (8, action_dim)
    assert jnp.allclose(out_small, ref_small, atol=1e-4, rtol=1e-4)

    # Larger batch: exercises the batch grid, row padding and 2-chunk interleave.
    x_big = jax.random.normal(kx2, (300, state_dim), dtype=jnp.float32)
    out_big = jax.block_until_ready(qnetwork_forward(x_big, params))
    ref_big = reference_forward(x_big, params)
    assert out_big.shape == (300, action_dim)
    assert jnp.allclose(out_big, ref_big, atol=1e-4, rtol=1e-4)

    print("KERNEL_OK")
</pallas_src>

<mosaic_0001>
module attributes {stable_mosaic.version = 11 : i64} {
  func.func @kernel(%arg0: i32, %arg1: memref<8x128xf32, #tpu.memory_space<vmem>>, %arg2: memref<168x256xf32, #tpu.memory_space<vmem>>, %arg3: memref<640x128xf32, #tpu.memory_space<vmem>>, %arg4: memref<8x128xf32, #tpu.memory_space<vmem>>) attributes {dimension_semantics = [#tpu.dimension_semantics<parallel>], iteration_bounds = array<i64: 1>, scalar_prefetch = 0 : i64, scratch_operands = 0 : i64, tpu.core_type = #tpu.core_type<tc>, window_params = [{transform_indices = @transform_0, window_bounds = array<i64: 8, 128>}, {pipeline_mode = #tpu.pipeline_mode<synchronous>, transform_indices = @transform_1, window_bounds = array<i64: 168, 256>}, {pipeline_mode = #tpu.pipeline_mode<synchronous>, transform_indices = @transform_2, window_bounds = array<i64: 640, 128>}, {transform_indices = @transform_3, window_bounds = array<i64: 8, 128>}]} {
    %c0 = arith.constant 0 : index
    %c0_0 = arith.constant 0 : index
    %0 = vector.load %arg2[%c0, %c0_0] : memref<168x256xf32, #tpu.memory_space<vmem>>, vector<128x256xf32>
    %c128 = arith.constant 128 : index
    %c0_1 = arith.constant 0 : index
    %1 = vector.load %arg2[%c128, %c0_1] : memref<168x256xf32, #tpu.memory_space<vmem>>, vector<1x256xf32>
    %c136 = arith.constant 136 : index
    %c0_2 = arith.constant 0 : index
    %2 = vector.load %arg2[%c136, %c0_2] : memref<168x256xf32, #tpu.memory_space<vmem>>, vector<1x128xf32>
    %c144 = arith.constant 144 : index
    %c0_3 = arith.constant 0 : index
    %3 = vector.load %arg2[%c144, %c0_3] : memref<168x256xf32, #tpu.memory_space<vmem>>, vector<1x128xf32>
    %c152 = arith.constant 152 : index
    %c0_4 = arith.constant 0 : index
    %4 = vector.load %arg2[%c152, %c0_4] : memref<168x256xf32, #tpu.memory_space<vmem>>, vector<1x128xf32>
    %c160 = arith.constant 160 : index
    %c0_5 = arith.constant 0 : index
    %5 = vector.load %arg2[%c160, %c0_5] : memref<168x256xf32, #tpu.memory_space<vmem>>, vector<1x128xf32>
    %c0_6 = arith.constant 0 : index
    %c0_7 = arith.constant 0 : index
    %6 = vector.load %arg3[%c0_6, %c0_7] : memref<640x128xf32, #tpu.memory_space<vmem>>, vector<256x128xf32>
    %c256 = arith.constant 256 : index
    %c0_8 = arith.constant 0 : index
    %7 = vector.load %arg3[%c256, %c0_8] : memref<640x128xf32, #tpu.memory_space<vmem>>, vector<128x128xf32>
    %c384 = arith.constant 384 : index
    %c0_9 = arith.constant 0 : index
    %8 = vector.load %arg3[%c384, %c0_9] : memref<640x128xf32, #tpu.memory_space<vmem>>, vector<128x128xf32>
    %c512 = arith.constant 512 : index
    %c0_10 = arith.constant 0 : index
    %9 = vector.load %arg3[%c512, %c0_10] : memref<640x128xf32, #tpu.memory_space<vmem>>, vector<128x128xf32>
    %c0_11 = arith.constant 0 : index
    %c0_12 = arith.constant 0 : index
    %10 = vector.load %arg1[%c0_11, %c0_12] : memref<8x128xf32, #tpu.memory_space<vmem>>, vector<8x128xf32>
    %cst = arith.constant dense<0.000000e+00> : vector<8x256xf32>
    %11 = tpu.matmul %10, %0, %cst {dimension_numbers = #tpu.dot_dimension_numbers<[1], [0], [0], [1], [0, 0, 1, 1], [], []>} : vector<8x128xf32>, vector<128x256xf32>, vector<8x256xf32> -> vector<8x256xf32>
    %12 = vector.broadcast %1 : vector<1x256xf32> to vector<8x256xf32>
    %13 = arith.addf %11, %12 : vector<8x256xf32>
    %cst_13 = arith.constant 0.000000e+00 : f32
    %14 = vector.broadcast %cst_13 : f32 to vector<8x256xf32>
    %15 = arith.maximumf %13, %14 : vector<8x256xf32>
    %cst_14 = arith.constant dense<0.000000e+00> : vector<8x128xf32>
    %16 = tpu.matmul %15, %6, %cst_14 {dimension_numbers = #tpu.dot_dimension_numbers<[1], [0], [0], [1], [0, 0, 1, 1], [], []>} : vector<8x256xf32>, vector<256x128xf32>, vector<8x128xf32> -> vector<8x128xf32>
    %17 = vector.broadcast %2 : vector<1x128xf32> to vector<8x128xf32>
    %18 = arith.addf %16, %17 : vector<8x128xf32>
    %cst_15 = arith.constant 0.000000e+00 : f32
    %19 = vector.broadcast %cst_15 : f32 to vector<8x128xf32>
    %20 = arith.maximumf %18, %19 : vector<8x128xf32>
    %cst_16 = arith.constant dense<0.000000e+00> : vector<8x128xf32>
    %21 = tpu.matmul %20, %7, %cst_16 {dimension_numbers = #tpu.dot_dimension_numbers<[1], [0], [0], [1], [0, 0, 1, 1], [], []>} : vector<8x128xf32>, vector<128x128xf32>, vector<8x128xf32> -> vector<8x128xf32>
    %22 = vector.broadcast %3 : vector<1x128xf32> to vector<8x128xf32>
    %23 = arith.addf %21, %22 : vector<8x128xf32>
    %cst_17 = arith.constant 0.000000e+00 : f32
    %24 = vector.broadcast %cst_17 : f32 to vector<8x128xf32>
    %25 = arith.maximumf %23, %24 : vector<8x128xf32>
    %cst_18 = arith.constant dense<0.000000e+00> : vector<8x128xf32>
    %26 = tpu.matmul %25, %8, %cst_18 {dimension_numbers = #tpu.dot_dimension_numbers<[1], [0], [0], [1], [0, 0, 1, 1], [], []>} : vector<8x128xf32>, vector<128x128xf32>, vector<8x128xf32> -> vector<8x128xf32>
    %27 = vector.broadcast %4 : vector<1x128xf32> to vector<8x128xf32>
    %28 = arith.addf %26, %27 : vector<8x128xf32>
    %cst_19 = arith.constant 0.000000e+00 : f32
    %29 = vector.broadcast %cst_19 : f32 to vector<8x128xf32>
    %30 = arith.maximumf %28, %29 : vector<8x128xf32>
    %cst_20 = arith.constant dense<0.000000e+00> : vector<8x128xf32>
    %31 = tpu.matmul %30, %9, %cst_20 {dimension_numbers = #tpu.dot_dimension_numbers<[1], [0], [0], [1], [0, 0, 1, 1], [], []>} : vector<8x128xf32>, vector<128x128xf32>, vector<8x128xf32> -> vector<8x128xf32>
    %32 = vector.broadcast %5 : vector<1x128xf32> to vector<8x128xf32>
    %33 = arith.addf %31, %32 : vector<8x128xf32>
    %c0_21 = arith.constant 0 : index
    %c0_22 = arith.constant 0 : index
    %34 = vector.load %arg4[%c0_21, %c0_22] : memref<8x128xf32, #tpu.memory_space<vmem>>, vector<8x128xf32>
    tpu.vector_store %arg4[%c0_21, %c0_22], %33 {strides = array<i32>} : memref<8x128xf32, #tpu.memory_space<vmem>>, vector<8x128xf32>,
    return
  }
  func.func @transform_0(%arg0: i32) -> (i32, i32) {
    %c0_i32 = arith.constant 0 : i32
    %c0_i32_0 = arith.constant 0 : i32
    return %arg0, %c0_i32 : i32, i32
  }
  func.func @transform_1(%arg0: i32) -> (i32, i32) {
    %c0_i32 = arith.constant 0 : i32
    %c0_i32_0 = arith.constant 0 : i32
    %c0_i32_1 = arith.constant 0 : i32
    return %c0_i32, %c0_i32_0 : i32, i32
  }
  func.func @transform_2(%arg0: i32) -> (i32, i32) {
    %c0_i32 = arith.constant 0 : i32
    %c0_i32_0 = arith.constant 0 : i32
    %c0_i32_1 = arith.constant 0 : i32
    return %c0_i32, %c0_i32_0 : i32, i32
  }
  func.func @transform_3(%arg0: i32) -> (i32, i32) {
    %c0_i32 = arith.constant 0 : i32
    %c0_i32_0 = arith.constant 0 : i32
    return %arg0, %c0_i32 : i32, i32
  }
}

</mosaic_0001>

<llo_original>
// kernel: qnetwork_forward.1
$region0: #{qnetwork_forward.1}
  #allocation0 [shape = 'u32[]', space=smem, size = 0x4, offset = 0x4, fixed_abs, tag = 'smem constant byte address 0x4 - core index']
  #allocation1 [shape = 'u32[144,128]{1,0:T(1,128)}', space=vmem, size = 0x12000, scoped, tag = 'internal scratch']
  %s0 = inlined_call_operand.vmem [shape: f32[8,128], index: 0, kind: input, shape index: {}]
  %s1 = inlined_call_operand.vmem [shape: f32[168,256], index: 1, kind: input, shape index: {}]
  %s2 = inlined_call_operand.vmem [shape: f32[640,128], index: 2, kind: input, shape index: {}]
  %s3 = inlined_call_operand.vmem [shape: f32[8,128], index: 3, kind: output, shape index: {}]
  %s4 = sld [smem:[#allocation0]]
  $region22: #{qnetwork_forward.1} parent=0
    _
  %s6 = ssub.s32 1, %s4
  %s7 = scalar_select 0, %s6, %s4
  // Predicated region
  $region2: #{qnetwork_forward.1} parent=0 // pred_check
    _
  $region3: #{qnetwork_forward.1} parent=0 // pred_check_branch
    %9 = sbr.rel (0) target = $region5
  $region4: #{qnetwork_forward.1} parent=0 // pred_region
    _
  $region5: #{qnetwork_forward.1} parent=0 // pred_fallthru
    _
  // Predicated region
  $region6: #{qnetwork_forward.1} parent=0 // pred_check
    _
  $region7: #{qnetwork_forward.1} parent=0 // pred_check_branch
    %11 = sbr.rel (0) target = $region9
  $region8: #{qnetwork_forward.1} parent=0 // pred_region
    _
  $region9: #{qnetwork_forward.1} parent=0 // pred_fallthru
    _
  // Predicated region
  $region10: #{qnetwork_forward.1} parent=0 // pred_check
    _
  $region11: #{qnetwork_forward.1} parent=0 // pred_check_branch
    %13 = sbr.rel (0) target = $region13
  $region12: #{qnetwork_forward.1} parent=0 // pred_region
    _
  $region13: #{qnetwork_forward.1} parent=0 // pred_fallthru
    _
  %v14 = vld [vmem:[%s1] sm:$0xff]
  %v15 = vld [vmem:[%s1 + $0x8] sm:$0xff]
  %v16 = vld [vmem:[%s1 + $0x10] sm:$0xff]
  %v17 = vld [vmem:[%s1 + $0x18] sm:$0xff]
  %v18 = vld [vmem:[%s1 + $0x20] sm:$0xff]
  %v19 = vld [vmem:[%s1 + $0x28] sm:$0xff]
  %v20 = vld [vmem:[%s1 + $0x30] sm:$0xff]
  %v21 = vld [vmem:[%s1 + $0x38] sm:$0xff]
  %v22 = vld [vmem:[%s1 + $0x40] sm:$0xff]
  %v23 = vld [vmem:[%s1 + $0x48] sm:$0xff]
  %v24 = vld [vmem:[%s1 + $0x50] sm:$0xff]
  %v25 = vld [vmem:[%s1 + $0x58] sm:$0xff]
  %v26 = vld [vmem:[%s1 + $0x60] sm:$0xff]
  %v27 = vld [vmem:[%s1 + $0x68] sm:$0xff]
  %v28 = vld [vmem:[%s1 + $0x70] sm:$0xff]
  %v29 = vld [vmem:[%s1 + $0x78] sm:$0xff]
  %v30 = vld [vmem:[%s1 + $0x80] sm:$0xff]
  %v31 = vld [vmem:[%s1 + $0x88] sm:$0xff]
  %v32 = vld [vmem:[%s1 + $0x90] sm:$0xff]
  %v33 = vld [vmem:[%s1 + $0x98] sm:$0xff]
  %v34 = vld [vmem:[%s1 + $0xa0] sm:$0xff]
  %v35 = vld [vmem:[%s1 + $0xa8] sm:$0xff]
  %v36 = vld [vmem:[%s1 + $0xb0] sm:$0xff]
  %v37 = vld [vmem:[%s1 + $0xb8] sm:$0xff]
  %v38 = vld [vmem:[%s1 + $0xc0] sm:$0xff]
  %v39 = vld [vmem:[%s1 + $0xc8] sm:$0xff]
  %v40 = vld [vmem:[%s1 + $0xd0] sm:$0xff]
  %v41 = vld [vmem:[%s1 + $0xd8] sm:$0xff]
  %v42 = vld [vmem:[%s1 + $0xe0] sm:$0xff]
  %v43 = vld [vmem:[%s1 + $0xe8] sm:$0xff]
  %v44 = vld [vmem:[%s1 + $0xf0] sm:$0xff]
  %v45 = vld [vmem:[%s1 + $0xf8] sm:$0xff]
  %s46 = scalar_lea.vmem %s1, 256
  %v47 = vld [vmem:[%s46] ss:$8 sm:$0x3]
  %v48 = vld [vmem:[%s1 + $0x110] ss:$0 sm:$0xff]
  %v49 = vld [vmem:[%s1 + $0x120] ss:$0 sm:$0xff]
  %v50 = vld [vmem:[%s1 + $0x130] ss:$0 sm:$0xff]
  %v51 = vld [vmem:[%s1 + $0x140] ss:$0 sm:$0xff]
  %v52 = vld [vmem:[%s2] sm:$0xff]
  %v53 = vld [vmem:[%s2 + $0x8] sm:$0xff]
  %v54 = vld [vmem:[%s2 + $0x10] sm:$0xff]
  %v55 = vld [vmem:[%s2 + $0x18] sm:$0xff]
  %v56 = vld [vmem:[%s2 + $0x20] sm:$0xff]
  %v57 = vld [vmem:[%s2 + $0x28] sm:$0xff]
  %v58 = vld [vmem:[%s2 + $0x30] sm:$0xff]
  %v59 = vld [vmem:[%s2 + $0x38] sm:$0xff]
  %v60 = vld [vmem:[%s2 + $0x40] sm:$0xff]
  %v61 = vld [vmem:[%s2 + $0x48] sm:$0xff]
  %v62 = vld [vmem:[%s2 + $0x50] sm:$0xff]
  %v63 = vld [vmem:[%s2 + $0x58] sm:$0xff]
  %v64 = vld [vmem:[%s2 + $0x60] sm:$0xff]
  %v65 = vld [vmem:[%s2 + $0x68] sm:$0xff]
  %v66 = vld [vmem:[%s2 + $0x70] sm:$0xff]
  %v67 = vld [vmem:[%s2 + $0x78] sm:$0xff]
  %v68 = vld [vmem:[%s2 + $0x80] sm:$0xff]
  %v69 = vld [vmem:[%s2 + $0x88] sm:$0xff]
  %v70 = vld [vmem:[%s2 + $0x90] sm:$0xff]
  %v71 = vld [vmem:[%s2 + $0x98] sm:$0xff]
  %v72 = vld [vmem:[%s2 + $0xa0] sm:$0xff]
  %v73 = vld [vmem:[%s2 + $0xa8] sm:$0xff]
  %v74 = vld [vmem:[%s2 + $0xb0] sm:$0xff]
  %v75 = vld [vmem:[%s2 + $0xb8] sm:$0xff]
  %v76 = vld [vmem:[%s2 + $0xc0] sm:$0xff]
  %v77 = vld [vmem:[%s2 + $0xc8] sm:$0xff]
  %v78 = vld [vmem:[%s2 + $0xd0] sm:$0xff]
  %v79 = vld [vmem:[%s2 + $0xd8] sm:$0xff]
  %v80 = vld [vmem:[%s2 + $0xe0] sm:$0xff]
  %v81 = vld [vmem:[%s2 + $0xe8] sm:$0xff]
  %v82 = vld [vmem:[%s2 + $0xf0] sm:$0xff]
  %v83 = vld [vmem:[%s2 + $0xf8] sm:$0xff]
  %v84 = vld [vmem:[%s2 + $0x100] sm:$0xff]
  %v85 = vld [vmem:[%s2 + $0x108] sm:$0xff]
  %v86 = vld [vmem:[%s2 + $0x110] sm:$0xff]
  %v87 = vld [vmem:[%s2 + $0x118] sm:$0xff]
  %v88 = vld [vmem:[%s2 + $0x120] sm:$0xff]
  %v89 = vld [vmem:[%s2 + $0x128] sm:$0xff]
  %v90 = vld [vmem:[%s2 + $0x130] sm:$0xff]
  %v91 = vld [vmem:[%s2 + $0x138] sm:$0xff]
  %v92 = vld [vmem:[%s2 + $0x140] sm:$0xff]
  %v93 = vld [vmem:[%s2 + $0x148] sm:$0xff]
  %v94 = vld [vmem:[%s2 + $0x150] sm:$0xff]
  %v95 = vld [vmem:[%s2 + $0x158] sm:$0xff]
  %v96 = vld [vmem:[%s2 + $0x160] sm:$0xff]
  %v97 = vld [vmem:[%s2 + $0x168] sm:$0xff]
  %v98 = vld [vmem:[%s2 + $0x170] sm:$0xff]
  %v99 = vld [vmem:[%s2 + $0x178] sm:$0xff]
  %v100 = vld [vmem:[%s2 + $0x180] sm:$0xff]
  %v101 = vld [vmem:[%s2 + $0x188] sm:$0xff]
  %v102 = vld [vmem:[%s2 + $0x190] sm:$0xff]
  %v103 = vld [vmem:[%s2 + $0x198] sm:$0xff]
  %v104 = vld [vmem:[%s2 + $0x1a0] sm:$0xff]
  %v105 = vld [vmem:[%s2 + $0x1a8] sm:$0xff]
  %v106 = vld [vmem:[%s2 + $0x1b0] sm:$0xff]
  %v107 = vld [vmem:[%s2 + $0x1b8] sm:$0xff]
  %v108 = vld [vmem:[%s2 + $0x1c0] sm:$0xff]
  %v109 = vld [vmem:[%s2 + $0x1c8] sm:$0xff]
  %v110 = vld [vmem:[%s2 + $0x1d0] sm:$0xff]
  %v111 = vld [vmem:[%s2 + $0x1d8] sm:$0xff]
  %v112 = vld [vmem:[%s2 + $0x1e0] sm:$0xff]
  %v113 = vld [vmem:[%s2 + $0x1e8] sm:$0xff]
  %v114 = vld [vmem:[%s2 + $0x1f0] sm:$0xff]
  %v115 = vld [vmem:[%s2 + $0x1f8] sm:$0xff]
  %v116 = vld [vmem:[%s2 + $0x200] sm:$0xff]
  %v117 = vld [vmem:[%s2 + $0x208] sm:$0xff]
  %v118 = vld [vmem:[%s2 + $0x210] sm:$0xff]
  %v119 = vld [vmem:[%s2 + $0x218] sm:$0xff]
  %v120 = vld [vmem:[%s2 + $0x220] sm:$0xff]
  %v121 = vld [vmem:[%s2 + $0x228] sm:$0xff]
  %v122 = vld [vmem:[%s2 + $0x230] sm:$0xff]
  %v123 = vld [vmem:[%s2 + $0x238] sm:$0xff]
  %v124 = vld [vmem:[%s2 + $0x240] sm:$0xff]
  %v125 = vld [vmem:[%s2 + $0x248] sm:$0xff]
  %v126 = vld [vmem:[%s2 + $0x250] sm:$0xff]
  %v127 = vld [vmem:[%s2 + $0x258] sm:$0xff]
  %v128 = vld [vmem:[%s2 + $0x260] sm:$0xff]
  %v129 = vld [vmem:[%s2 + $0x268] sm:$0xff]
  %v130 = vld [vmem:[%s2 + $0x270] sm:$0xff]
  %v131 = vld [vmem:[%s2 + $0x278] sm:$0xff]
  %v132 = vld [vmem:[%s0] sm:$0xff]
  %v134 = vlaneseq
  %v135 = vshrl.u32 %v134, 7
  %v136 = vsub.s32 0, %v135
  %v137 = vrot.slane %v47, %v136
  %v138 = vlaneseq
  %v139 = vshrl.u32 %v138, 7
  %v140 = vsub.s32 1, %v139
  %v141 = vrot.slane %v47, %v140
  %144 = vmatprep.subr.mxu0 %v45
  %145 = vmatpush1.msra.mxu0 %v44
  %146 = vmatprep.subr.mxu0 %v43
  %147 = vmatpush1.msra.mxu0 %v42
  %148 = vmatprep.subr.mxu0 %v41
  %149 = vmatpush1.msra.mxu0 %v40
  %150 = vmatprep.subr.mxu0 %v39
  %151 = vmatpush1.msra.mxu0 %v38
  %152 = vmatprep.subr.mxu0 %v37
  %153 = vmatpush1.msra.mxu0 %v36
  %154 = vmatprep.subr.mxu0 %v35
  %155 = vmatpush1.msra.mxu0 %v34
  %156 = vmatprep.subr.mxu0 %v33
  %157 = vmatpush1.msra.mxu0 %v32
  %158 = vmatprep.subr.mxu0 %v31
  %159 = vmatpush1.msra.mxu0 %v30
  %160 = vmatprep.subr.mxu0 %v29
  %161 = vmatpush1.msra.mxu0 %v28
  %162 = vmatprep.subr.mxu0 %v27
  %163 = vmatpush1.msra.mxu0 %v26
  %164 = vmatprep.subr.mxu0 %v25
  %165 = vmatpush1.msra.mxu0 %v24
  %166 = vmatprep.subr.mxu0 %v23
  %167 = vmatpush1.msra.mxu0 %v22
  %168 = vmatprep.subr.mxu0 %v21
  %169 = vmatpush1.msra.mxu0 %v20
  %170 = vmatprep.subr.mxu0 %v19
  %171 = vmatpush1.msra.mxu0 %v18
  %172 = vmatprep.subr.mxu0 %v17
  %173 = vmatpush1.msra.mxu0 %v16
  %174 = vmatprep.subr.mxu0 %v15
  %175 = vmatpush1.msra.mxu0 %v14
  %176 = vmatprep.subr.mxu0 0.0
  %177 = vmatpush2.msra.mxu0 0.0
  %178 = vmatprep.subr.mxu0 0.0
  %179 = vmatpush2.msra.mxu0 0.0
  %180 = vmatprep.subr.mxu0 0.0
  %181 = vmatpush2.msra.mxu0 0.0
  %182 = vmatprep.subr.mxu0 0.0
  %183 = vmatpush2.msra.mxu0 0.0
  %184 = vmatprep.subr.mxu0 0.0
  %185 = vmatpush2.msra.mxu0 0.0
  %186 = vmatprep.subr.mxu0 0.0
  %187 = vmatpush2.msra.mxu0 0.0
  %188 = vmatprep.subr.mxu0 0.0
  %189 = vmatpush2.msra.mxu0 0.0
  %190 = vmatprep.subr.mxu0 0.0
  %191 = vmatpush2.msra.mxu0 0.0
  %192 = vmatprep.subr.mxu0 0.0
  %193 = vmatpush2.msra.mxu0 0.0
  %194 = vmatprep.subr.mxu0 0.0
  %195 = vmatpush2.msra.mxu0 0.0
  %196 = vmatprep.subr.mxu0 0.0
  %197 = vmatpush2.msra.mxu0 0.0
  %198 = vmatprep.subr.mxu0 0.0
  %199 = vmatpush2.msra.mxu0 0.0
  %200 = vmatprep.subr.mxu0 0.0
  %201 = vmatpush2.msra.mxu0 0.0
  %202 = vmatprep.subr.mxu0 0.0
  %203 = vmatpush2.msra.mxu0 0.0
  %204 = vmatprep.subr.mxu0 0.0
  %205 = vmatpush2.msra.mxu0 0.0
  %206 = vmatprep.subr.mxu0 0.0
  %207 = vmatpush2.msra.mxu0 0.0
  %208 = vmatprep.mubr.f32.mxu0 0.0
  %209 = vmatmul.mubr.f32.gmra.mxu0 %v132
  %v210 = vpop.f32.mrf.mxu0
  %v211 = vadd.f32 %v137, %v210
  %v212 = vpop.f32.mrf.mxu0
  %v213 = vadd.f32 %v141, %v212
  %214 = vdwg.mxu0
  %v215 = vmax.f32 %v211, 0.0
  %v216 = vmax.f32 %v213, 0.0
  %217 = vmatprep.subr.mxu0 0.0
  %218 = vmatpush1.msra.mxu0 %v67
  %219 = vmatprep.subr.mxu0 0.0
  %220 = vmatpush1.msra.mxu0 %v66
  %221 = vmatprep.subr.mxu0 0.0
  %222 = vmatpush1.msra.mxu0 %v65
  %223 = vmatprep.subr.mxu0 0.0
  %224 = vmatpush1.msra.mxu0 %v64
  %225 = vmatprep.subr.mxu0 0.0
  %226 = vmatpush1.msra.mxu0 %v63
  %227 = vmatprep.subr.mxu0 0.0
  %228 = vmatpush1.msra.mxu0 %v62
  %229 = vmatprep.subr.mxu0 0.0
  %230 = vmatpush1.msra.mxu0 %v61
  %231 = vmatprep.subr.mxu0 0.0
  %232 = vmatpush1.msra.mxu0 %v60
  %233 = vmatprep.subr.mxu0 0.0
  %234 = vmatpush1.msra.mxu0 %v59
  %235 = vmatprep.subr.mxu0 0.0
  %236 = vmatpush1.msra.mxu0 %v58
  %237 = vmatprep.subr.mxu0 0.0
  %238 = vmatpush1.msra.mxu0 %v57
  %239 = vmatprep.subr.mxu0 0.0
  %240 = vmatpush1.msra.mxu0 %v56
  %241 = vmatprep.subr.mxu0 0.0
  %242 = vmatpush1.msra.mxu0 %v55
  %243 = vmatprep.subr.mxu0 0.0
  %244 = vmatpush1.msra.mxu0 %v54
  %245 = vmatprep.subr.mxu0 0.0
  %246 = vmatpush1.msra.mxu0 %v53
  %247 = vmatprep.subr.mxu0 0.0
  %248 = vmatpush1.msra.mxu0 %v52
  %249 = vmatprep.subr.mxu0 0.0
  %250 = vmatpush2.msra.mxu0 %v83
  %251 = vmatprep.subr.mxu0 0.0
  %252 = vmatpush2.msra.mxu0 %v82
  %253 = vmatprep.subr.mxu0 0.0
  %254 = vmatpush2.msra.mxu0 %v81
  %255 = vmatprep.subr.mxu0 0.0
  %256 = vmatpush2.msra.mxu0 %v80
  %257 = vmatprep.subr.mxu0 0.0
  %258 = vmatpush2.msra.mxu0 %v79
  %259 = vmatprep.subr.mxu0 0.0
  %260 = vmatpush2.msra.mxu0 %v78
  %261 = vmatprep.subr.mxu0 0.0
  %262 = vmatpush2.msra.mxu0 %v77
  %263 = vmatprep.subr.mxu0 0.0
  %264 = vmatpush2.msra.mxu0 %v76
  %265 = vmatprep.subr.mxu0 0.0
  %266 = vmatpush2.msra.mxu0 %v75
  %267 = vmatprep.subr.mxu0 0.0
  %268 = vmatpush2.msra.mxu0 %v74
  %269 = vmatprep.subr.mxu0 0.0
  %270 = vmatpush2.msra.mxu0 %v73
  %271 = vmatprep.subr.mxu0 0.0
  %272 = vmatpush2.msra.mxu0 %v72
  %273 = vmatprep.subr.mxu0 0.0
  %274 = vmatpush2.msra.mxu0 %v71
  %275 = vmatprep.subr.mxu0 0.0
  %276 = vmatpush2.msra.mxu0 %v70
  %277 = vmatprep.subr.mxu0 0.0
  %278 = vmatpush2.msra.mxu0 %v69
  %279 = vmatprep.subr.mxu0 0.0
  %280 = vmatpush2.msra.mxu0 %v68
  %281 = vmatprep.mubr.f32.mxu0 %v216
  %282 = vmatmul.mubr.f32.gmra.mxu0 %v215
  %v283 = vpop.f32.mrf.mxu0
  %v284 = vadd.f32 %v48, %v283
  %v285 = vpop.f32.mrf.mxu0
  %286 = vdwg.mxu0
  %v287 = vmax.f32 %v284, 0.0
  %288 = vmatprep.subr.mxu0 0.0
  %289 = vmatpush1.msra.mxu0 %v99
  %290 = vmatprep.subr.mxu0 0.0
  %291 = vmatpush1.msra.mxu0 %v98
  %292 = vmatprep.subr.mxu0 0.0
  %293 = vmatpush1.msra.mxu0 %v97
  %294 = vmatprep.subr.mxu0 0.0
  %295 = vmatpush1.msra.mxu0 %v96
  %296 = vmatprep.subr.mxu0 0.0
  %297 = vmatpush1.msra.mxu0 %v95
  %298 = vmatprep.subr.mxu0 0.0
  %299 = vmatpush1.msra.mxu0 %v94
  %300 = vmatprep.subr.mxu0 0.0
  %301 = vmatpush1.msra.mxu0 %v93
  %302 = vmatprep.subr.mxu0 0.0
  %303 = vmatpush1.msra.mxu0 %v92
  %304 = vmatprep.subr.mxu0 0.0
  %305 = vmatpush1.msra.mxu0 %v91
  %306 = vmatprep.subr.mxu0 0.0
  %307 = vmatpush1.msra.mxu0 %v90
  %308 = vmatprep.subr.mxu0 0.0
  %309 = vmatpush1.msra.mxu0 %v89
  %310 = vmatprep.subr.mxu0 0.0
  %311 = vmatpush1.msra.mxu0 %v88
  %312 = vmatprep.subr.mxu0 0.0
  %313 = vmatpush1.msra.mxu0 %v87
  %314 = vmatprep.subr.mxu0 0.0
  %315 = vmatpush1.msra.mxu0 %v86
  %316 = vmatprep.subr.mxu0 0.0
  %317 = vmatpush1.msra.mxu0 %v85
  %318 = vmatprep.subr.mxu0 0.0
  %319 = vmatpush1.msra.mxu0 %v84
  %320 = vmatprep.subr.mxu0 0.0
  %321 = vmatpush2.msra.mxu0 0.0
  %322 = vmatprep.subr.mxu0 0.0
  %323 = vmatpush2.msra.mxu0 0.0
  %324 = vmatprep.subr.mxu0 0.0
  %325 = vmatpush2.msra.mxu0 0.0
  %326 = vmatprep.subr.mxu0 0.0
  %327 = vmatpush2.msra.mxu0 0.0
  %328 = vmatprep.subr.mxu0 0.0
  %329 = vmatpush2.msra.mxu0 0.0
  %330 = vmatprep.subr.mxu0 0.0
  %331 = vmatpush2.msra.mxu0 0.0
  %332 = vmatprep.subr.mxu0 0.0
  %333 = vmatpush2.msra.mxu0 0.0
  %334 = vmatprep.subr.mxu0 0.0
  %335 = vmatpush2.msra.mxu0 0.0
  %336 = vmatprep.subr.mxu0 0.0
  %337 = vmatpush2.msra.mxu0 0.0
  %338 = vmatprep.subr.mxu0 0.0
  %339 = vmatpush2.msra.mxu0 0.0
  %340 = vmatprep.subr.mxu0 0.0
  %341 = vmatpush2.msra.mxu0 0.0
  %342 = vmatprep.subr.mxu0 0.0
  %343 = vmatpush2.msra.mxu0 0.0
  %344 = vmatprep.subr.mxu0 0.0
  %345 = vmatpush2.msra.mxu0 0.0
  %346 = vmatprep.subr.mxu0 0.0
  %347 = vmatpush2.msra.mxu0 0.0
  %348 = vmatprep.subr.mxu0 0.0
  %349 = vmatpush2.msra.mxu0 0.0
  %350 = vmatprep.subr.mxu0 0.0
  %351 = vmatpush2.msra.mxu0 0.0
  %352 = vmatprep.mubr.f32.mxu0 0.0
  %353 = vmatmul.mubr.f32.gmra.mxu0 %v287
  %v354 = vpop.f32.mrf.mxu0
  %v355 = vadd.f32 %v49, %v354
  %v356 = vpop.f32.mrf.mxu0
  %357 = vdwg.mxu0
  %v358 = vmax.f32 %v355, 0.0
  %359 = vmatprep.subr.mxu0 0.0
  %360 = vmatpush1.msra.mxu0 %v115
  %361 = vmatprep.subr.mxu0 0.0
  %362 = vmatpush1.msra.mxu0 %v114
  %363 = vmatprep.subr.mxu0 0.0
  %364 = vmatpush1.msra.mxu0 %v113
  %365 = vmatprep.subr.mxu0 0.0
  %366 = vmatpush1.msra.mxu0 %v112
  %367 = vmatprep.subr.mxu0 0.0
  %368 = vmatpush1.msra.mxu0 %v111
  %369 = vmatprep.subr.mxu0 0.0
  %370 = vmatpush1.msra.mxu0 %v110
  %371 = vmatprep.subr.mxu0 0.0
  %372 = vmatpush1.msra.mxu0 %v109
  %373 = vmatprep.subr.mxu0 0.0
  %374 = vmatpush1.msra.mxu0 %v108
  %375 = vmatprep.subr.mxu0 0.0
  %376 = vmatpush1.msra.mxu0 %v107
  %377 = vmatprep.subr.mxu0 0.0
  %378 = vmatpush1.msra.mxu0 %v106
  %379 = vmatprep.subr.mxu0 0.0
  %380 = vmatpush1.msra.mxu0 %v105
  %381 = vmatprep.subr.mxu0 0.0
  %382 = vmatpush1.msra.mxu0 %v104
  %383 = vmatprep.subr.mxu0 0.0
  %384 = vmatpush1.msra.mxu0 %v103
  %385 = vmatprep.subr.mxu0 0.0
  %386 = vmatpush1.msra.mxu0 %v102
  %387 = vmatprep.subr.mxu0 0.0
  %388 = vmatpush1.msra.mxu0 %v101
  %389 = vmatprep.subr.mxu0 0.0
  %390 = vmatpush1.msra.mxu0 %v100
  %391 = vmatprep.subr.mxu0 0.0
  %392 = vmatpush2.msra.mxu0 0.0
  %393 = vmatprep.subr.mxu0 0.0
  %394 = vmatpush2.msra.mxu0 0.0
  %395 = vmatprep.subr.mxu0 0.0
  %396 = vmatpush2.msra.mxu0 0.0
  %397 = vmatprep.subr.mxu0 0.0
  %398 = vmatpush2.msra.mxu0 0.0
  %399 = vmatprep.subr.mxu0 0.0
  %400 = vmatpush2.msra.mxu0 0.0
  %401 = vmatprep.subr.mxu0 0.0
  %402 = vmatpush2.msra.mxu0 0.0
  %403 = vmatprep.subr.mxu0 0.0
  %404 = vmatpush2.msra.mxu0 0.0
  %405 = vmatprep.subr.mxu0 0.0
  %406 = vmatpush2.msra.mxu0 0.0
  %407 = vmatprep.subr.mxu0 0.0
  %408 = vmatpush2.msra.mxu0 0.0
  %409 = vmatprep.subr.mxu0 0.0
  %410 = vmatpush2.msra.mxu0 0.0
  %411 = vmatprep.subr.mxu0 0.0
  %412 = vmatpush2.msra.mxu0 0.0
  %413 = vmatprep.subr.mxu0 0.0
  %414 = vmatpush2.msra.mxu0 0.0
  %415 = vmatprep.subr.mxu0 0.0
  %416 = vmatpush2.msra.mxu0 0.0
  %417 = vmatprep.subr.mxu0 0.0
  %418 = vmatpush2.msra.mxu0 0.0
  %419 = vmatprep.subr.mxu0 0.0
  %420 = vmatpush2.msra.mxu0 0.0
  %421 = vmatprep.subr.mxu0 0.0
  %422 = vmatpush2.msra.mxu0 0.0
  %423 = vmatprep.mubr.f32.mxu0 0.0
  %424 = vmatmul.mubr.f32.gmra.mxu0 %v358
  %v425 = vpop.f32.mrf.mxu0
  %v426 = vadd.f32 %v50, %v425
  %v427 = vpop.f32.mrf.mxu0
  %428 = vdwg.mxu0
  %v429 = vmax.f32 %v426, 0.0
  %430 = vmatprep.subr.mxu0 0.0
  %431 = vmatpush1.msra.mxu0 %v131
  %432 = vmatprep.subr.mxu0 0.0
  %433 = vmatpush1.msra.mxu0 %v130
  %434 = vmatprep.subr.mxu0 0.0
  %435 = vmatpush1.msra.mxu0 %v129
  %436 = vmatprep.subr.mxu0 0.0
  %437 = vmatpush1.msra.mxu0 %v128
  %438 = vmatprep.subr.mxu0 0.0
  %439 = vmatpush1.msra.mxu0 %v127
  %440 = vmatprep.subr.mxu0 0.0
  %441 = vmatpush1.msra.mxu0 %v126
  %442 = vmatprep.subr.mxu0 0.0
  %443 = vmatpush1.msra.mxu0 %v125
  %444 = vmatprep.subr.mxu0 0.0
  %445 = vmatpush1.msra.mxu0 %v124
  %446 = vmatprep.subr.mxu0 0.0
  %447 = vmatpush1.msra.mxu0 %v123
  %448 = vmatprep.subr.mxu0 0.0
  %449 = vmatpush1.msra.mxu0 %v122
  %450 = vmatprep.subr.mxu0 0.0
  %451 = vmatpush1.msra.mxu0 %v121
  %452 = vmatprep.subr.mxu0 0.0
  %453 = vmatpush1.msra.mxu0 %v120
  %454 = vmatprep.subr.mxu0 0.0
  %455 = vmatpush1.msra.mxu0 %v119
  %456 = vmatprep.subr.mxu0 0.0
  %457 = vmatpush1.msra.mxu0 %v118
  %458 = vmatprep.subr.mxu0 0.0
  %459 = vmatpush1.msra.mxu0 %v117
  %460 = vmatprep.subr.mxu0 0.0
  %461 = vmatpush1.msra.mxu0 %v116
  %462 = vmatprep.subr.mxu0 0.0
  %463 = vmatpush2.msra.mxu0 0.0
  %464 = vmatprep.subr.mxu0 0.0
  %465 = vmatpush2.msra.mxu0 0.0
  %466 = vmatprep.subr.mxu0 0.0
  %467 = vmatpush2.msra.mxu0 0.0
  %468 = vmatprep.subr.mxu0 0.0
  %469 = vmatpush2.msra.mxu0 0.0
  %470 = vmatprep.subr.mxu0 0.0
  %471 = vmatpush2.msra.mxu0 0.0
  %472 = vmatprep.subr.mxu0 0.0
  %473 = vmatpush2.msra.mxu0 0.0
  %474 = vmatprep.subr.mxu0 0.0
  %475 = vmatpush2.msra.mxu0 0.0
  %476 = vmatprep.subr.mxu0 0.0
  %477 = vmatpush2.msra.mxu0 0.0
  %478 = vmatprep.subr.mxu0 0.0
  %479 = vmatpush2.msra.mxu0 0.0
  %480 = vmatprep.subr.mxu0 0.0
  %481 = vmatpush2.msra.mxu0 0.0
  %482 = vmatprep.subr.mxu0 0.0
  %483 = vmatpush2.msra.mxu0 0.0
  %484 = vmatprep.subr.mxu0 0.0
  %485 = vmatpush2.msra.mxu0 0.0
  %486 = vmatprep.subr.mxu0 0.0
  %487 = vmatpush2.msra.mxu0 0.0
  %488 = vmatprep.subr.mxu0 0.0
  %489 = vmatpush2.msra.mxu0 0.0
  %490 = vmatprep.subr.mxu0 0.0
  %491 = vmatpush2.msra.mxu0 0.0
  %492 = vmatprep.subr.mxu0 0.0
  %493 = vmatpush2.msra.mxu0 0.0
  %494 = vmatprep.mubr.f32.mxu0 0.0
  %495 = vmatmul.mubr.f32.gmra.mxu0 %v429
  %v496 = vpop.f32.mrf.mxu0
  %v497 = vadd.f32 %v51, %v496
  %v498 = vpop.f32.mrf.mxu0
  %499 = vdwg.mxu0
  %500 = vst [vmem:[%s3] sm:$0xff] %v497
  // Predicated region
  $region14: #{qnetwork_forward.1} parent=0 // pred_check
    _
  $region15: #{qnetwork_forward.1} parent=0 // pred_check_branch
    %502 = sbr.rel (0) target = $region17
  $region16: #{qnetwork_forward.1} parent=0 // pred_region
    _
  $region17: #{qnetwork_forward.1} parent=0 // pred_fallthru
    _
  // Predicated region
  $region18: #{qnetwork_forward.1} parent=0 // pred_check
    _
  $region19: #{qnetwork_forward.1} parent=0 // pred_check_branch
    %504 = sbr.rel (0) target = $region21
  $region20: #{qnetwork_forward.1} parent=0 // pred_region
    _
  $region21: #{qnetwork_forward.1} parent=0 // pred_fallthru
    _

</llo_original>
